<compile_context>
chip_gen: v6e
topology: v6e:2x2x1
jax: 0.10.0
libtpu: 0.0.40
codegen_flags: <defaults>
</compile_context>

<pallas_src>
import jax
import jax.numpy as jnp
from jax.experimental import pallas as pl
from jax.experimental.pallas import tpu as pltpu


def _round_up(a, b):
    return (a + b - 1) // b * b


def swiglu_kernel(x_ref, w12_ref, b12_ref, wo_ref, bo_ref, o_ref, acc_ref):
    # x_ref:   (tm, dim_p)        row tile, resident across the hidden axis
    # w12_ref: (dim_p, 2*hk)      fused [w1 | w2] chunk for hidden chunk k
    # b12_ref: (1, 2*hk)          fused [b1 | b2] chunk
    # wo_ref:  (hk, dim_p)        output-projection rows for hidden chunk k
    # bo_ref:  (1, dim_p)         output bias (added once, at finalize)
    # acc_ref: (tm, dim_p) f32    VMEM accumulator over hidden chunks
    k = pl.program_id(1)

    @pl.when(k == 0)
    def _():
        acc_ref[...] = jnp.zeros_like(acc_ref)

    # Single fused gate matmul on the MXU: native-dtype operands, f32 accum.
    h = jnp.dot(x_ref[...], w12_ref[...], preferred_element_type=jnp.float32)
    h = h + b12_ref[...].astype(jnp.float32)

    hk = h.shape[-1] // 2
    h1 = h[:, :hk]
    h2 = h[:, hk:]
    gated = (h1 * jax.nn.sigmoid(h1)) * h2          # SiLU(h1) * h2, in f32

    acc_ref[...] += jnp.dot(gated.astype(wo_ref.dtype), wo_ref[...],
                            preferred_element_type=jnp.float32)

    @pl.when(k == pl.num_programs(1) - 1)
    def _():
        o_ref[...] = (acc_ref[...] + bo_ref[...].astype(jnp.float32)
                      ).astype(o_ref.dtype)


def swiglu(x, w1, b1, w2, b2, wo, bo, *, tm=256, hidden_chunk=512):
    """x: (..., dim) -> (..., dim).  Weights stored (in_features, out_features)."""
    dim = x.shape[-1]
    hidden = w1.shape[1]
    lead_shape = x.shape[:-1]
    out_dtype = x.dtype

    x2d = x.reshape(-1, dim)
    n = x2d.shape[0]

    # --- row tiling: shrink tm for tiny inputs, pad rows to a tile multiple ---
    tm = min(tm, _round_up(n, 16))          # 16 keeps bf16 sublane packing happy
    n_pad = _round_up(n, tm)
    if n_pad != n:
        x2d = jnp.pad(x2d, ((0, n_pad - n), (0, 0)))

    # --- pad the model dim to a lane-dense multiple of 128 ---
    dim_p = _round_up(dim, 128)
    if dim_p != dim:
        x2d = jnp.pad(x2d, ((0, 0), (0, dim_p - dim)))
        w1 = jnp.pad(w1, ((0, dim_p - dim), (0, 0)))
        w2 = jnp.pad(w2, ((0, dim_p - dim), (0, 0)))
        wo = jnp.pad(wo, ((0, 0), (0, dim_p - dim)))
        bo = jnp.pad(bo, (0, dim_p - dim))

    # --- hidden-chunk tiling (reduction axis of the second matmul) ---
    hk = hidden if hidden <= hidden_chunk else hidden_chunk
    hid_p = _round_up(hidden, hk)
    if hid_p != hidden:
        # Zero-padding is exact: padded columns give h1 = 0 -> silu(0) = 0,
        # so the padded hidden units contribute nothing to the output.
        w1 = jnp.pad(w1, ((0, 0), (0, hid_p - hidden)))
        w2 = jnp.pad(w2, ((0, 0), (0, hid_p - hidden)))
        b1 = jnp.pad(b1, (0, hid_p - hidden))
        b2 = jnp.pad(b2, (0, hid_p - hidden))
        wo = jnp.pad(wo, ((0, hid_p - hidden), (0, 0)))
    nk = hid_p // hk

    # --- wrapper-side weight fusion / chunking (do once per model in practice) ---
    w12 = jnp.concatenate(
        [w1.reshape(dim_p, nk, hk), w2.reshape(dim_p, nk, hk)], axis=-1
    ).transpose(1, 0, 2)                                    # (nk, dim_p, 2*hk)
    b12 = jnp.concatenate(
        [b1.reshape(nk, 1, hk), b2.reshape(nk, 1, hk)], axis=-1)   # (nk, 1, 2*hk)
    woc = wo.reshape(nk, hk, dim_p)                                # (nk, hk, dim_p)
    bo2 = bo.reshape(1, dim_p)

    grid = (n_pad // tm, nk)

    flops = 2 * n_pad * dim_p * hid_p * 3
    bytes_accessed = (
        (x2d.size + w12.size + b12.size + woc.size + bo2.size) * x2d.dtype.itemsize
        + n_pad * dim_p * jnp.dtype(out_dtype).itemsize
    )

    out = pl.pallas_call(
        swiglu_kernel,
        out_shape=jax.ShapeDtypeStruct((n_pad, dim_p), out_dtype),
        grid_spec=pltpu.PrefetchScalarGridSpec(
            num_scalar_prefetch=0,
            grid=grid,
            in_specs=[
                pl.BlockSpec((tm, dim_p), lambda i, k: (i, 0)),           # x rows
                pl.BlockSpec((None, dim_p, 2 * hk), lambda i, k: (k, 0, 0)),  # [w1|w2] chunk
                pl.BlockSpec((None, 1, 2 * hk), lambda i, k: (k, 0, 0)),      # [b1|b2] chunk
                pl.BlockSpec((None, hk, dim_p), lambda i, k: (k, 0, 0)),      # wo chunk
                pl.BlockSpec((1, dim_p), lambda i, k: (0, 0)),                # bo
            ],
            out_specs=pl.BlockSpec((tm, dim_p), lambda i, k: (i, 0)),
            scratch_shapes=[pltpu.VMEM((tm, dim_p), jnp.float32)],
        ),
        compiler_params=pltpu.CompilerParams(
            dimension_semantics=("parallel", "arbitrary"),
            vmem_limit_bytes=64 * 1024 * 1024,
        ),
        cost_estimate=pl.CostEstimate(
            flops=int(flops),
            transcendentals=int(n_pad * hid_p),
            bytes_accessed=int(bytes_accessed),
        ),
    )(x2d, w12, b12, woc, bo2)

    out = out[:n, :dim]
    return out.reshape(*lead_shape, dim)


def init_params(key, dim, hidden_dim, dtype=jnp.float32):
    """Deterministic init matching nn.Linear shapes (uniform +/- 1/sqrt(fan_in))."""
    ks = jax.random.split(key, 6)
    lim1 = 1.0 / jnp.sqrt(dim)
    lim2 = 1.0 / jnp.sqrt(hidden_dim)
    # stored as (in_features, out_features), i.e. x @ W + b == x @ W_torch.T + b
    w1 = jax.random.uniform(ks[0], (dim, hidden_dim), dtype, -lim1, lim1)
    b1 = jax.random.uniform(ks[1], (hidden_dim,), dtype, -lim1, lim1)
    w2 = jax.random.uniform(ks[2], (dim, hidden_dim), dtype, -lim1, lim1)
    b2 = jax.random.uniform(ks[3], (hidden_dim,), dtype, -lim1, lim1)
    wo = jax.random.uniform(ks[4], (hidden_dim, dim), dtype, -lim2, lim2)
    bo = jax.random.uniform(ks[5], (dim,), dtype, -lim2, lim2)
    return w1, b1, w2, b2, wo, bo


def swiglu_ref(x, w1, b1, w2, b2, wo, bo):
    h1 = x @ w1 + b1
    h2 = x @ w2 + b2
    return (jax.nn.silu(h1) * h2) @ wo + bo


if __name__ == "__main__":
    key = jax.random.PRNGKey(0)
    k_x, k_p = jax.random.split(key)

    batch, seq, dim, hidden_dim = 2, 8, 32, 64
    x = jax.random.normal(k_x, (batch, seq, dim), jnp.float32)
    params = init_params(k_p, dim, hidden_dim)

    out = swiglu(x, *params)
    out = jax.block_until_ready(out)

    ref = swiglu_ref(x, *params)
    assert out.shape == (batch, seq, dim)
    assert jnp.allclose(out, ref, atol=1e-5, rtol=1e-5), "mismatch vs reference"

    print("KERNEL_OK")
</pallas_src>

<mosaic_0001>
module attributes {stable_mosaic.version = 11 : i64} {
  func.func @swiglu_kernel(%arg0: i32, %arg1: i32, %arg2: memref<16x128xf32, #tpu.memory_space<vmem>>, %arg3: memref<1x128x128xf32, #tpu.memory_space<vmem>>, %arg4: memref<1x1x128xf32, #tpu.memory_space<vmem>>, %arg5: memref<1x64x128xf32, #tpu.memory_space<vmem>>, %arg6: memref<1x128xf32, #tpu.memory_space<vmem>>, %arg7: memref<16x128xf32, #tpu.memory_space<vmem>>, %arg8: memref<16x128xf32, #tpu.memory_space<vmem>>) attributes {dimension_semantics = [#tpu.dimension_semantics<parallel>, #tpu.dimension_semantics<arbitrary>], iteration_bounds = array<i64: 1, 1>, scalar_prefetch = 0 : i64, scratch_operands = 1 : i64, tpu.core_type = #tpu.core_type<tc>, window_params = [{transform_indices = @transform_0, window_bounds = array<i64: 16, 128>}, {transform_indices = @transform_1, window_bounds = array<i64: 1, 128, 128>}, {transform_indices = @transform_2, window_bounds = array<i64: 1, 1, 128>}, {transform_indices = @transform_3, window_bounds = array<i64: 1, 64, 128>}, {pipeline_mode = #tpu.pipeline_mode<synchronous>, transform_indices = @transform_4, window_bounds = array<i64: 1, 128>}, {transform_indices = @transform_5, window_bounds = array<i64: 16, 128>}]} {
    %c0_i32 = arith.constant 0 : i32
    %0 = arith.cmpi eq, %arg1, %c0_i32 : i32
    %1 = arith.extui %0 : i1 to i32
    %c0_i32_0 = arith.constant 0 : i32
    %2 = arith.cmpi ne, %1, %c0_i32_0 : i32
    scf.if %2 {
      %cst_19 = arith.constant 0.000000e+00 : f32
      %29 = vector.broadcast %cst_19 : f32 to vector<16x128xf32>
      %c0_20 = arith.constant 0 : index
      %c0_21 = arith.constant 0 : index
      %30 = vector.load %arg8[%c0_20, %c0_21] : memref<16x128xf32, #tpu.memory_space<vmem>>, vector<16x128xf32>
      tpu.vector_store %arg8[%c0_20, %c0_21], %29 {strides = array<i32>} : memref<16x128xf32, #tpu.memory_space<vmem>>, vector<16x128xf32>,
    } else {
    }
    %c0 = arith.constant 0 : index
    %c0_1 = arith.constant 0 : index
    %3 = vector.load %arg2[%c0, %c0_1] : memref<16x128xf32, #tpu.memory_space<vmem>>, vector<16x128xf32>
    %c0_2 = arith.constant 0 : index
    %c0_3 = arith.constant 0 : index
    %c0_4 = arith.constant 0 : index
    %4 = vector.load %arg3[%c0_2, %c0_3, %c0_4] : memref<1x128x128xf32, #tpu.memory_space<vmem>>, vector<1x128x128xf32>
    %5 = vector.shape_cast %4 : vector<1x128x128xf32> to vector<128x128xf32>
    %cst = arith.constant dense<0.000000e+00> : vector<16x128xf32>
    %6 = tpu.matmul %3, %5, %cst {dimension_numbers = #tpu.dot_dimension_numbers<[1], [0], [0], [1], [0, 0, 1, 1], [], []>} : vector<16x128xf32>, vector<128x128xf32>, vector<16x128xf32> -> vector<16x128xf32>
    %c0_5 = arith.constant 0 : index
    %c0_6 = arith.constant 0 : index
    %c0_7 = arith.constant 0 : index
    %7 = vector.load %arg4[%c0_5, %c0_6, %c0_7] : memref<1x1x128xf32, #tpu.memory_space<vmem>>, vector<1x1x128xf32>
    %8 = vector.shape_cast %7 : vector<1x1x128xf32> to vector<1x128xf32>
    %9 = vector.broadcast %8 : vector<1x128xf32> to vector<16x128xf32>
    %10 = arith.addf %6, %9 : vector<16x128xf32>
    %11 = vector.extract_strided_slice %10 {offsets = [0, 0], sizes = [16, 64], strides = [1, 1]} : vector<16x128xf32> to vector<16x64xf32>
    %12 = vector.extract_strided_slice %10 {offsets = [0, 64], sizes = [16, 64], strides = [1, 1]} : vector<16x128xf32> to vector<16x64xf32>
    %13 = arith.negf %11 : vector<16x64xf32>
    %14 = math.exp %13 : vector<16x64xf32>
    %cst_8 = arith.constant 1.000000e+00 : f32
    %15 = vector.broadcast %cst_8 : f32 to vector<16x64xf32>
    %16 = arith.addf %15, %14 : vector<16x64xf32>
    %17 = arith.divf %15, %16 : vector<16x64xf32>
    %18 = arith.mulf %11, %17 : vector<16x64xf32>
    %19 = arith.mulf %18, %12 : vector<16x64xf32>
    %c0_9 = arith.constant 0 : index
    %c0_10 = arith.constant 0 : index
    %20 = vector.load %arg8[%c0_9, %c0_10] : memref<16x128xf32, #tpu.memory_space<vmem>>, vector<16x128xf32>
    %c0_11 = arith.constant 0 : index
    %c0_12 = arith.constant 0 : index
    %c0_13 = arith.constant 0 : index
    %21 = vector.load %arg5[%c0_11, %c0_12, %c0_13] : memref<1x64x128xf32, #tpu.memory_space<vmem>>, vector<1x64x128xf32>
    %22 = vector.shape_cast %21 : vector<1x64x128xf32> to vector<64x128xf32>
    %cst_14 = arith.constant dense<0.000000e+00> : vector<16x128xf32>
    %23 = tpu.matmul %19, %22, %cst_14 {dimension_numbers = #tpu.dot_dimension_numbers<[1], [0], [0], [1], [0, 0, 1, 1], [], []>} : vector<16x64xf32>, vector<64x128xf32>, vector<16x128xf32> -> vector<16x128xf32>
    %24 = arith.addf %20, %23 : vector<16x128xf32>
    %c0_15 = arith.constant 0 : index
    %c0_16 = arith.constant 0 : index
    %25 = vector.load %arg8[%c0_15, %c0_16] : memref<16x128xf32, #tpu.memory_space<vmem>>, vector<16x128xf32>
    tpu.vector_store %arg8[%c0_15, %c0_16], %24 {strides = array<i32>} : memref<16x128xf32, #tpu.memory_space<vmem>>, vector<16x128xf32>,
    %c0_i32_17 = arith.constant 0 : i32
    %26 = arith.cmpi eq, %arg1, %c0_i32_17 : i32
    %27 = arith.extui %26 : i1 to i32
    %c0_i32_18 = arith.constant 0 : i32
    %28 = arith.cmpi ne, %27, %c0_i32_18 : i32
    scf.if %28 {
      %c0_19 = arith.constant 0 : index
      %c0_20 = arith.constant 0 : index
      %29 = vector.load %arg8[%c0_19, %c0_20] : memref<16x128xf32, #tpu.memory_space<vmem>>, vector<16x128xf32>
      %c0_21 = arith.constant 0 : index
      %c0_22 = arith.constant 0 : index
      %30 = vector.load %arg6[%c0_21, %c0_22] : memref<1x128xf32, #tpu.memory_space<vmem>>, vector<1x128xf32>
      %31 = vector.broadcast %30 : vector<1x128xf32> to vector<16x128xf32>
      %32 = arith.addf %29, %31 : vector<16x128xf32>
      %c0_23 = arith.constant 0 : index
      %c0_24 = arith.constant 0 : index
      %33 = vector.load %arg7[%c0_23, %c0_24] : memref<16x128xf32, #tpu.memory_space<vmem>>, vector<16x128xf32>
      tpu.vector_store %arg7[%c0_23, %c0_24], %32 {strides = array<i32>} : memref<16x128xf32, #tpu.memory_space<vmem>>, vector<16x128xf32>,
    } else {
    }
    return
  }
  func.func @transform_0(%arg0: i32, %arg1: i32) -> (i32, i32) {
    %c0_i32 = arith.constant 0 : i32
    %c0_i32_0 = arith.constant 0 : i32
    return %arg0, %c0_i32 : i32, i32
  }
  func.func @transform_1(%arg0: i32, %arg1: i32) -> (i32, i32, i32) {
    %c0_i32 = arith.constant 0 : i32
    %c0_i32_0 = arith.constant 0 : i32
    %c0_i32_1 = arith.constant 0 : i32
    return %arg1, %c0_i32, %c0_i32_0 : i32, i32, i32
  }
  func.func @transform_2(%arg0: i32, %arg1: i32) -> (i32, i32, i32) {
    %c0_i32 = arith.constant 0 : i32
    %c0_i32_0 = arith.constant 0 : i32
    %c0_i32_1 = arith.constant 0 : i32
    return %arg1, %c0_i32, %c0_i32_0 : i32, i32, i32
  }
  func.func @transform_3(%arg0: i32, %arg1: i32) -> (i32, i32, i32) {
    %c0_i32 = arith.constant 0 : i32
    %c0_i32_0 = arith.constant 0 : i32
    %c0_i32_1 = arith.constant 0 : i32
    return %arg1, %c0_i32, %c0_i32_0 : i32, i32, i32
  }
  func.func @transform_4(%arg0: i32, %arg1: i32) -> (i32, i32) {
    %c0_i32 = arith.constant 0 : i32
    %c0_i32_0 = arith.constant 0 : i32
    %c0_i32_1 = arith.constant 0 : i32
    return %c0_i32, %c0_i32_0 : i32, i32
  }
  func.func @transform_5(%arg0: i32, %arg1: i32) -> (i32, i32) {
    %c0_i32 = arith.constant 0 : i32
    %c0_i32_0 = arith.constant 0 : i32
    return %arg0, %c0_i32 : i32, i32
  }
}

</mosaic_0001>

<llo_original>
// kernel: tpu_custom_call.1
$region0: #{tpu_custom_call.1}
  #allocation0 [shape = 'u32[]', space=smem, size = 0x4, offset = 0x4, fixed_abs, tag = 'smem constant byte address 0x4 - core index']
  #allocation1 [shape = 'u32[144,128]{1,0:T(1,128)}', space=vmem, size = 0x12000, scoped, tag = 'internal scratch']
  #allocation2 [shape = 'f32[16,128]{1,0:T(8,128)}', space=vmem, size = 0x2000, scoped, tag = 'scratch operand']
  %s0 = inlined_call_operand.hbm [shape: f32[16,128], index: 0, kind: input, shape index: {}]
  %s1 = inlined_call_operand.hbm [shape: f32[1,128,128], index: 1, kind: input, shape index: {}]
  %s2 = inlined_call_operand.vmem [shape: f32[1,1,128], index: 2, kind: input, shape index: {}]
  %s3 = inlined_call_operand.hbm [shape: f32[1,64,128], index: 3, kind: input, shape index: {}]
  %s4 = inlined_call_operand.vmem [shape: f32[1,128], index: 4, kind: input, shape index: {}]
  %s5 = inlined_call_operand.hbm [shape: f32[16,128], index: 5, kind: output, shape index: {}]
  %s6 = sld [smem:[#allocation0]]
  $region50: #{tpu_custom_call.1} parent=0
    _
  %s8 = ssub.s32 1, %s6
  %s9 = scalar_select 0, %s8, %s6
  $region1: #{tpu_custom_call.1} parent=0
    #allocation3 [shape = 'u8[8192]{0}', space=vmem, size = 0x2000, scoped, tag = 'input window, operand 0, single buffered']
    #allocation4 [shape = 's32[1]{0}', space=sflag, size = 0x4, scoped, tag = 'scoped memory for tpu_custom_call.1']
    #allocation5 [shape = 's32[1]{0}', space=sflag, size = 0x4, scoped, tag = 'scoped memory for tpu_custom_call.1']
    #allocation6 [shape = 'u8[65536]{0}', space=vmem, size = 0x10000, scoped, tag = 'input window, operand 1, single buffered']
    #allocation7 [shape = 's32[1]{0}', space=sflag, size = 0x4, scoped, tag = 'scoped memory for tpu_custom_call.1']
    #allocation8 [shape = 'u8[32768]{0}', space=vmem, size = 0x8000, scoped, tag = 'input window, operand 3, single buffered']
    #allocation9 [shape = 'u8[8192]{0}', space=vmem, size = 0x2000, scoped, tag = 'output window, operand 0, single buffered']
    %10 = vsyncpa [#allocation4], 0
    %11 = vsyncpa [#allocation7], 0
    %12 = vsyncpa [#allocation5], 0
    // Predicated region
    $region2: #{tpu_custom_call.1} parent=1 // pred_check
      _
    $region3: #{tpu_custom_call.1} parent=1 // pred_check_branch
      %14 = sbr.rel (0) target = $region5
    $region4: #{tpu_custom_call.1} parent=1 // pred_region
      %s16 = ssub.s32 256, 256
      %17 = vsyncadd [#allocation4], %s16
      %s18 = sshll.u32 [#allocation3], 4
      %s19 = int_to_ptr.vmem [resolvable:$true] %s18
      %24 = dma.hbm_to_vmem [thread:$0]  %s0, 256, %s19, [#allocation4], 128, 128, 8
    $region5: #{tpu_custom_call.1} parent=1 // pred_fallthru
      _
    // Predicated region
    $region6: #{tpu_custom_call.1} parent=1 // pred_check
      _
    $region7: #{tpu_custom_call.1} parent=1 // pred_check_branch
      %26 = sbr.rel (0) target = $region9
    $region8: #{tpu_custom_call.1} parent=1 // pred_region
      %s28 = ssub.s32 2048, 2048
      %29 = vsyncadd [#allocation7], %s28
      %s30 = sshll.u32 [#allocation6], 4
      %s31 = int_to_ptr.vmem [resolvable:$true] %s30
      %36 = dma.hbm_to_vmem [thread:$0]  %s1, 2048, %s31, [#allocation7], 128, 128, 8
    $region9: #{tpu_custom_call.1} parent=1 // pred_fallthru
      _
    // Predicated region
    $region10: #{tpu_custom_call.1} parent=1 // pred_check
      _
    $region11: #{tpu_custom_call.1} parent=1 // pred_check_branch
      %38 = sbr.rel (0) target = $region13
    $region12: #{tpu_custom_call.1} parent=1 // pred_region
      _
    $region13: #{tpu_custom_call.1} parent=1 // pred_fallthru
      _
    // Predicated region
    $region14: #{tpu_custom_call.1} parent=1 // pred_check
      _
    $region15: #{tpu_custom_call.1} parent=1 // pred_check_branch
      %40 = sbr.rel (0) target = $region17
    $region16: #{tpu_custom_call.1} parent=1 // pred_region
      %s42 = ssub.s32 1024, 1024
      %43 = vsyncadd [#allocation7], %s42
      %s44 = sshll.u32 [#allocation8], 4
      %s45 = int_to_ptr.vmem [resolvable:$true] %s44
      %50 = dma.hbm_to_vmem [thread:$0]  %s3, 1024, %s45, [#allocation7], 128, 128, 8
    $region17: #{tpu_custom_call.1} parent=1 // pred_fallthru
      _
    // Predicated region
    $region18: #{tpu_custom_call.1} parent=1 // pred_check
      _
    $region19: #{tpu_custom_call.1} parent=1 // pred_check_branch
      %52 = sbr.rel (0) target = $region21
    $region20: #{tpu_custom_call.1} parent=1 // pred_region
      _
    $region21: #{tpu_custom_call.1} parent=1 // pred_fallthru
      _
    // Predicated region
    $region22: #{tpu_custom_call.1} parent=1 // pred_check
      _
    $region23: #{tpu_custom_call.1} parent=1 // pred_check_branch
      %54 = sbr.rel (0) target = $region25
    $region24: #{tpu_custom_call.1} parent=1 // pred_region
      %55 = dma.done [#allocation4], 256
    $region25: #{tpu_custom_call.1} parent=1 // pred_fallthru
      _
    // Predicated region
    $region26: #{tpu_custom_call.1} parent=1 // pred_check
      _
    $region27: #{tpu_custom_call.1} parent=1 // pred_check_branch
      %57 = sbr.rel (0) target = $region29
    $region28: #{tpu_custom_call.1} parent=1 // pred_region
      %58 = dma.done [#allocation7], 2048
    $region29: #{tpu_custom_call.1} parent=1 // pred_fallthru
      _
    // Predicated region
    $region30: #{tpu_custom_call.1} parent=1 // pred_check
      _
    $region31: #{tpu_custom_call.1} parent=1 // pred_check_branch
      %60 = sbr.rel (0) target = $region33
    $region32: #{tpu_custom_call.1} parent=1 // pred_region
      %61 = dma.done [#allocation7], 1024
    $region33: #{tpu_custom_call.1} parent=1 // pred_fallthru
      _
    %p62 = scmp.eq.s32.totalorder 0, 0
    // Predicated region
    $region34: #{tpu_custom_call.1} parent=1 // pred_check
      %p63 = pneg %p62
    $region35: #{tpu_custom_call.1} parent=1 // pred_check_branch
      %65 = sbr.rel (%p63) target = $region37
    $region36: #{tpu_custom_call.1} parent=1 // pred_region
      %66 = vst [vmem:[#allocation2] sm:$0xff] 0.0
      %67 = vst [vmem:[#allocation2 + $0x8] sm:$0xff] 0.0
    $region37: #{tpu_custom_call.1} parent=1 // pred_fallthru
      _
    %v68 = vld [vmem:[#allocation3] sm:$0xff]
    %v69 = vld [vmem:[#allocation3 + $0x8] sm:$0xff]
    %v70 = vld [vmem:[#allocation6] sm:$0xff]
    %v71 = vld [vmem:[#allocation6 + $0x8] sm:$0xff]
    %v72 = vld [vmem:[#allocation6 + $0x10] sm:$0xff]
    %v73 = vld [vmem:[#allocation6 + $0x18] sm:$0xff]
    %v74 = vld [vmem:[#allocation6 + $0x20] sm:$0xff]
    %v75 = vld [vmem:[#allocation6 + $0x28] sm:$0xff]
    %v76 = vld [vmem:[#allocation6 + $0x30] sm:$0xff]
    %v77 = vld [vmem:[#allocation6 + $0x38] sm:$0xff]
    %v78 = vld [vmem:[#allocation6 + $0x40] sm:$0xff]
    %v79 = vld [vmem:[#allocation6 + $0x48] sm:$0xff]
    %v80 = vld [vmem:[#allocation6 + $0x50] sm:$0xff]
    %v81 = vld [vmem:[#allocation6 + $0x58] sm:$0xff]
    %v82 = vld [vmem:[#allocation6 + $0x60] sm:$0xff]
    %v83 = vld [vmem:[#allocation6 + $0x68] sm:$0xff]
    %v84 = vld [vmem:[#allocation6 + $0x70] sm:$0xff]
    %v85 = vld [vmem:[#allocation6 + $0x78] sm:$0xff]
    %v86 = vld [vmem:[%s2] sm:$0x1]
    %v88 = vlaneseq
    %v89 = vshrl.u32 %v88, 7
    %v90 = vsub.s32 0, %v89
    %v91 = vrot.slane %v86, %v90
    %93 = vmatprep.subr.mxu0 0.0
    %94 = vmatpush1.msra.mxu0 %v85
    %95 = vmatprep.subr.mxu0 0.0
    %96 = vmatpush1.msra.mxu0 %v84
    %97 = vmatprep.subr.mxu0 0.0
    %98 = vmatpush1.msra.mxu0 %v83
    %99 = vmatprep.subr.mxu0 0.0
    %100 = vmatpush1.msra.mxu0 %v82
    %101 = vmatprep.subr.mxu0 0.0
    %102 = vmatpush1.msra.mxu0 %v81
    %103 = vmatprep.subr.mxu0 0.0
    %104 = vmatpush1.msra.mxu0 %v80
    %105 = vmatprep.subr.mxu0 0.0
    %106 = vmatpush1.msra.mxu0 %v79
    %107 = vmatprep.subr.mxu0 0.0
    %108 = vmatpush1.msra.mxu0 %v78
    %109 = vmatprep.subr.mxu0 0.0
    %110 = vmatpush1.msra.mxu0 %v77
    %111 = vmatprep.subr.mxu0 0.0
    %112 = vmatpush1.msra.mxu0 %v76
    %113 = vmatprep.subr.mxu0 0.0
    %114 = vmatpush1.msra.mxu0 %v75
    %115 = vmatprep.subr.mxu0 0.0
    %116 = vmatpush1.msra.mxu0 %v74
    %117 = vmatprep.subr.mxu0 0.0
    %118 = vmatpush1.msra.mxu0 %v73
    %119 = vmatprep.subr.mxu0 0.0
    %120 = vmatpush1.msra.mxu0 %v72
    %121 = vmatprep.subr.mxu0 0.0
    %122 = vmatpush1.msra.mxu0 %v71
    %123 = vmatprep.subr.mxu0 0.0
    %124 = vmatpush1.msra.mxu0 %v70
    %125 = vmatprep.subr.mxu0 0.0
    %126 = vmatpush2.msra.mxu0 0.0
    %127 = vmatprep.subr.mxu0 0.0
    %128 = vmatpush2.msra.mxu0 0.0
    %129 = vmatprep.subr.mxu0 0.0
    %130 = vmatpush2.msra.mxu0 0.0
    %131 = vmatprep.subr.mxu0 0.0
    %132 = vmatpush2.msra.mxu0 0.0
    %133 = vmatprep.subr.mxu0 0.0
    %134 = vmatpush2.msra.mxu0 0.0
    %135 = vmatprep.subr.mxu0 0.0
    %136 = vmatpush2.msra.mxu0 0.0
    %137 = vmatprep.subr.mxu0 0.0
    %138 = vmatpush2.msra.mxu0 0.0
    %139 = vmatprep.subr.mxu0 0.0
    %140 = vmatpush2.msra.mxu0 0.0
    %141 = vmatprep.subr.mxu0 0.0
    %142 = vmatpush2.msra.mxu0 0.0
    %143 = vmatprep.subr.mxu0 0.0
    %144 = vmatpush2.msra.mxu0 0.0
    %145 = vmatprep.subr.mxu0 0.0
    %146 = vmatpush2.msra.mxu0 0.0
    %147 = vmatprep.subr.mxu0 0.0
    %148 = vmatpush2.msra.mxu0 0.0
    %149 = vmatprep.subr.mxu0 0.0
    %150 = vmatpush2.msra.mxu0 0.0
    %151 = vmatprep.subr.mxu0 0.0
    %152 = vmatpush2.msra.mxu0 0.0
    %153 = vmatprep.subr.mxu0 0.0
    %154 = vmatpush2.msra.mxu0 0.0
    %155 = vmatprep.subr.mxu0 0.0
    %156 = vmatpush2.msra.mxu0 0.0
    %157 = vmatprep.mubr.f32.mxu0 0.0
    %158 = vmatmul.mubr.f32.gmra.mxu0 %v68
    %v159 = vpop.f32.mrf.mxu0
    %v160 = vadd.f32 %v91, %v159
    %v161 = vpop.f32.mrf.mxu0
    %162 = vmatprep.mubr.f32.mxu0 0.0
    %163 = vmatmul.mubr.f32.gmra.mxu0 %v69
    %v164 = vpop.f32.mrf.mxu0
    %v165 = vadd.f32 %v91, %v164
    %v166 = vpop.f32.mrf.mxu0
    %167 = vdwg.mxu0
    %v168 = vxor.u32 %v160, 2147483648
    %v169 = vxor.u32 %v165, 2147483648
    %v170 = vmul.f32 %v168, 1.442695
    %v171 = vpow.pop %v170
    %v172 = vmul.f32 %v169, 1.442695
    %v173 = vpow.pop %v172
    %v174 = vadd.f32 %v171, 1.0
    %v175 = vadd.f32 %v173, 1.0
    %v176 = vrcp.pop %v174
    %v177 = vmul.f32 1.0, %v176
    %v178 = vrcp.pop %v175
    %v179 = vmul.f32 1.0, %v178
    %v180 = vmul.f32 %v160, %v177
    %v181 = vmul.f32 %v165, %v179
    %184 = vrot.lane.b32.xlu0 %v160, 64
    %v185 = vpop.permute.xlu0 %184
    %186 = vrot.lane.b32.xlu0 %v165, 64
    %v187 = vpop.permute.xlu0 %186
    %v190 = vmul.f32 %v180, %v185
    %v191 = vmul.f32 %v181, %v187
    %v192 = vld [vmem:[#allocation2] sm:$0xff]
    %v193 = vld [vmem:[#allocation2 + $0x8] sm:$0xff]
    %v194 = vld [vmem:[#allocation8] sm:$0xff]
    %v195 = vld [vmem:[#allocation8 + $0x8] sm:$0xff]
    %v196 = vld [vmem:[#allocation8 + $0x10] sm:$0xff]
    %v197 = vld [vmem:[#allocation8 + $0x18] sm:$0xff]
    %v198 = vld [vmem:[#allocation8 + $0x20] sm:$0xff]
    %v199 = vld [vmem:[#allocation8 + $0x28] sm:$0xff]
    %v200 = vld [vmem:[#allocation8 + $0x30] sm:$0xff]
    %v201 = vld [vmem:[#allocation8 + $0x38] sm:$0xff]
    %vm202 = vcmask 523264
    %v204 = vsel %vm202, %v190, 0
    %v207 = vsel %vm202, %v191, 0
    %209 = vmatprep.subr.mxu0 0.0
    %210 = vmatpush1.msra.mxu0 0.0
    %211 = vmatprep.subr.mxu0 0.0
    %212 = vmatpush1.msra.mxu0 0.0
    %213 = vmatprep.subr.mxu0 0.0
    %214 = vmatpush1.msra.mxu0 0.0
    %215 = vmatprep.subr.mxu0 0.0
    %216 = vmatpush1.msra.mxu0 0.0
    %217 = vmatprep.subr.mxu0 0.0
    %218 = vmatpush1.msra.mxu0 0.0
    %219 = vmatprep.subr.mxu0 0.0
    %220 = vmatpush1.msra.mxu0 0.0
    %221 = vmatprep.subr.mxu0 0.0
    %222 = vmatpush1.msra.mxu0 0.0
    %223 = vmatprep.subr.mxu0 0.0
    %224 = vmatpush1.msra.mxu0 0.0
    %225 = vmatprep.subr.mxu0 0.0
    %226 = vmatpush1.msra.mxu0 %v201
    %227 = vmatprep.subr.mxu0 0.0
    %228 = vmatpush1.msra.mxu0 %v200
    %229 = vmatprep.subr.mxu0 0.0
    %230 = vmatpush1.msra.mxu0 %v199
    %231 = vmatprep.subr.mxu0 0.0
    %232 = vmatpush1.msra.mxu0 %v198
    %233 = vmatprep.subr.mxu0 0.0
    %234 = vmatpush1.msra.mxu0 %v197
    %235 = vmatprep.subr.mxu0 0.0
    %236 = vmatpush1.msra.mxu0 %v196
    %237 = vmatprep.subr.mxu0 0.0
    %238 = vmatpush1.msra.mxu0 %v195
    %239 = vmatprep.subr.mxu0 0.0
    %240 = vmatpush1.msra.mxu0 %v194
    %241 = vmatprep.subr.mxu0 0.0
    %242 = vmatpush2.msra.mxu0 0.0
    %243 = vmatprep.subr.mxu0 0.0
    %244 = vmatpush2.msra.mxu0 0.0
    %245 = vmatprep.subr.mxu0 0.0
    %246 = vmatpush2.msra.mxu0 0.0
    %247 = vmatprep.subr.mxu0 0.0
    %248 = vmatpush2.msra.mxu0 0.0
    %249 = vmatprep.subr.mxu0 0.0
    %250 = vmatpush2.msra.mxu0 0.0
    %251 = vmatprep.subr.mxu0 0.0
    %252 = vmatpush2.msra.mxu0 0.0
    %253 = vmatprep.subr.mxu0 0.0
    %254 = vmatpush2.msra.mxu0 0.0
    %255 = vmatprep.subr.mxu0 0.0
    %256 = vmatpush2.msra.mxu0 0.0
    %257 = vmatprep.subr.mxu0 0.0
    %258 = vmatpush2.msra.mxu0 0.0
    %259 = vmatprep.subr.mxu0 0.0
    %260 = vmatpush2.msra.mxu0 0.0
    %261 = vmatprep.subr.mxu0 0.0
    %262 = vmatpush2.msra.mxu0 0.0
    %263 = vmatprep.subr.mxu0 0.0
    %264 = vmatpush2.msra.mxu0 0.0
    %265 = vmatprep.subr.mxu0 0.0
    %266 = vmatpush2.msra.mxu0 0.0
    %267 = vmatprep.subr.mxu0 0.0
    %268 = vmatpush2.msra.mxu0 0.0
    %269 = vmatprep.subr.mxu0 0.0
    %270 = vmatpush2.msra.mxu0 0.0
    %271 = vmatprep.subr.mxu0 0.0
    %272 = vmatpush2.msra.mxu0 0.0
    %273 = vmatprep.mubr.f32.mxu0 0.0
    %274 = vmatmul.mubr.f32.gmra.mxu0 %v204
    %v275 = vpop.f32.mrf.mxu0
    %v276 = vadd.f32 0.0, %v275
    %v277 = vpop.f32.mrf.mxu0
    %278 = vmatprep.mubr.f32.mxu0 0.0
    %279 = vmatmul.mubr.f32.gmra.mxu0 %v207
    %v280 = vpop.f32.mrf.mxu0
    %v281 = vadd.f32 0.0, %v280
    %v282 = vpop.f32.mrf.mxu0
    %283 = vdwg.mxu0
    %v284 = vadd.f32 %v192, %v276
    %v285 = vadd.f32 %v193, %v281
    %286 = vst [vmem:[#allocation2] sm:$0xff] %v284
    %287 = vst [vmem:[#allocation2 + $0x8] sm:$0xff] %v285
    // Predicated region
    $region38: #{tpu_custom_call.1} parent=1 // pred_check
      %p288 = pneg %p62
    $region39: #{tpu_custom_call.1} parent=1 // pred_check_branch
      %290 = sbr.rel (%p288) target = $region41
    $region40: #{tpu_custom_call.1} parent=1 // pred_region
      %v291 = vld [vmem:[#allocation2] sm:$0xff]
      %v292 = vld [vmem:[#allocation2 + $0x8] sm:$0xff]
      %v293 = vld [vmem:[%s4] sm:$0x1]
      %v295 = vlaneseq
      %v296 = vshrl.u32 %v295, 7
      %v297 = vsub.s32 0, %v296
      %v298 = vrot.slane %v293, %v297
      %v300 = vadd.f32 %v291, %v298
      %v301 = vadd.f32 %v292, %v298
      %302 = vst [vmem:[#allocation9] sm:$0xff] %v300
      %303 = vst [vmem:[#allocation9 + $0x8] sm:$0xff] %v301
    $region41: #{tpu_custom_call.1} parent=1 // pred_fallthru
      _
    // Predicated region
    $region42: #{tpu_custom_call.1} parent=1 // pred_check
      _
    $region43: #{tpu_custom_call.1} parent=1 // pred_check_branch
      %305 = sbr.rel (0) target = $region45
    $region44: #{tpu_custom_call.1} parent=1 // pred_region
      %s307 = ssub.s32 256, 256
      %308 = vsyncadd [#allocation5], %s307
      %s309 = sshll.u32 [#allocation9], 4
      %s310 = int_to_ptr.vmem [resolvable:$true] %s309
      %315 = dma.vmem_to_hbm [thread:$0]  %s310, 256, %s5, [#allocation5], 128, 128, 8
    $region45: #{tpu_custom_call.1} parent=1 // pred_fallthru
      _
    // Predicated region
    $region46: #{tpu_custom_call.1} parent=1 // pred_check
      _
    $region47: #{tpu_custom_call.1} parent=1 // pred_check_branch
      %317 = sbr.rel (0) target = $region49
    $region48: #{tpu_custom_call.1} parent=1 // pred_region
      %318 = dma.done [#allocation5], 256
    $region49: #{tpu_custom_call.1} parent=1 // pred_fallthru
      _
    %319 = vsyncpa [#allocation4], 1
    %320 = vsyncpa [#allocation7], 1
    %321 = vsyncpa [#allocation5], 1

</llo_original>
